<compile_context>
chip_gen: v6e
topology: v6e:2x2x1
jax: 0.10.0
libtpu: 0.0.40
codegen_flags: <defaults>
</compile_context>

<pallas_src>
import functools

import jax
import jax.numpy as jnp
from jax.experimental import pallas as pl
from jax.experimental.pallas import tpu as pltpu


def _reconstruct_kernel(K, pad, N, Cin, Cout, Hs, Ws, eps,
                        wmix_ref, xup_ref, xskip_ref, masks_ref,
                        wdw_ref, bdw_ref, wpw_ref, bpw_ref,
                        gamma_ref, beta_ref, y_ref):
    """Whole batch in one step.

    Layout: rows = batch*channels on sublanes, flat spatial (Hs*Ws) on lanes.
      xup_ref   : (N*Cin , HW)  nearest-upsampled input
      xskip_ref : (N*Cout, HW)  skip input x
      masks_ref : (K*K   , HW)  precomputed zero-padding boundary masks
      wdw_ref   : (N*Cin , K*K) per-channel depthwise tap weights (batch-tiled)
      wpw_ref   : (N*Cout, N*Cin) block-diagonal 1x1-conv weights
      y_ref     : (N*Cout, HW)  final (post-BN, post-ReLU) output
    """
    HW = Hs * Ws
    NCin = N * Cin

    xup = xup_ref[...]                                        # (N*Cin, HW) f32

    # ---- depthwise KxK conv: lane roll (XLU) + precomputed mask + VPU FMA.
    acc = jnp.zeros((NCin, HW), jnp.float32)
    for di in range(K):
        for dj in range(K):
            a = di - pad
            b = dj - pad
            s = a * Ws + b                                    # flat lane offset of the tap
            shifted = xup if s == 0 else pltpu.roll(xup, shift=(-s) % HW, axis=1)
            t = di * K + dj
            # (N*Cin,1) weight splat * (1,HW) boundary mask splat * shifted
            acc = acc + shifted * wdw_ref[:, t:t + 1] * masks_ref[t:t + 1, :]
    acc = acc + bdw_ref[...]                                  # (N*Cin, 1) bias

    # ---- 1x1 conv: one tiny block-diagonal MXU matmul (lane-dense result).
    y = jnp.dot(wpw_ref[...], acc, preferred_element_type=jnp.float32)
    y = y + bpw_ref[...]                                      # (N*Cout, 1) bias

    # ---- weighted combination with the skip input x.
    out = wmix_ref[0] * y + wmix_ref[1] * xskip_ref[...]      # (N*Cout, HW)

    # ---- BatchNorm2d (training-mode batch statistics) fully in-kernel.
    col = jnp.sum(out, axis=1, keepdims=True)                 # (N*Cout, 1) lane reduce
    col2 = jnp.sum(out * out, axis=1, keepdims=True)
    s1 = col[0:Cout, :]
    s2 = col2[0:Cout, :]
    for n in range(1, N):                                     # cross-batch reduce (aligned slices)
        s1 = s1 + col[n * Cout:(n + 1) * Cout, :]
        s2 = s2 + col2[n * Cout:(n + 1) * Cout, :]
    inv_cnt = 1.0 / float(N * HW)
    mean = s1 * inv_cnt
    # TODO(synk): E[x^2]-E[x]^2 matches the reference at these magnitudes;
    # switch to a mean-subtracted second pass if activations grow large.
    var = s2 * inv_cnt - mean * mean
    scale = gamma_ref[...] / jnp.sqrt(var + eps)              # (Cout, 1)
    shift = beta_ref[...] - mean * scale                      # (Cout, 1)

    # ---- apply BN affine + ReLU per batch block (aligned sublane slices).
    for n in range(N):
        blk = out[n * Cout:(n + 1) * Cout, :]
        y_ref[n * Cout:(n + 1) * Cout, :] = jnp.maximum(blk * scale + shift, 0.0)


@functools.partial(jax.jit, static_argnames=("kernel_size", "scale_factor", "eps"))
def reconstruct_forward(x_C, x, params, *, kernel_size, scale_factor, eps=1e-5):
    """x_C: (N, Cin, H, W), x: (N, Cout, H*sf, W*sf) — NCHW like the PyTorch module."""
    K = kernel_size
    # Module uses padding=1 only for K==3; any other K>1 would shrink the output
    # and break the residual add in the original module too — make it explicit.
    assert K in (1, 3), "Reconstruct semantics only well-defined for kernel_size in {1, 3}"
    pad = 1 if K == 3 else 0
    sf = scale_factor
    N, Cin, H, W = x_C.shape
    Hs, Ws = H * sf, W * sf
    HW = Hs * Ws
    Cout = params["wpw"].shape[1]
    assert x.shape == (N, Cout, Hs, Ws)
    f32 = jnp.float32

    # ---- tiny parameter-only glue.
    wmix = jax.nn.softmax(params["wmix"].astype(f32))                      # (2,)
    wdw_t = jnp.tile(params["wdw"].reshape(K * K, Cin).T, (N, 1))          # (N*Cin, K*K)
    bdw = jnp.tile(params["bdw"].reshape(Cin, 1).astype(f32), (N, 1))      # (N*Cin, 1)
    wpw_blk = jnp.kron(jnp.eye(N, dtype=f32), params["wpw"].T.astype(f32)) # (N*Cout, N*Cin)
    bpw = jnp.tile(params["bpw"].reshape(Cout, 1).astype(f32), (N, 1))     # (N*Cout, 1)
    gamma = params["gamma"].reshape(Cout, 1).astype(f32)
    beta = params["beta"].reshape(Cout, 1).astype(f32)

    # Nearest upsample done by XLA in the wrapper (linear-size intermediate);
    # replaces the quadratic (H*W, Hs*Ws) one-hot matmul of the old kernel.
    xup = jnp.repeat(jnp.repeat(x_C.astype(f32), sf, axis=2), sf, axis=3)
    xup = xup.reshape(N * Cin, HW)                 # batch folded into sublanes
    xskip = x.astype(f32).reshape(N * Cout, HW)

    # Precomputed zero-padding boundary masks, one (1, HW) row per tap (9 KiB-ish).
    ii = jnp.arange(HW, dtype=jnp.int32) // Ws
    jj = jnp.arange(HW, dtype=jnp.int32) % Ws
    mask_rows = []
    for di in range(K):
        for dj in range(K):
            a, b = di - pad, dj - pad
            m = ((ii + a >= 0) & (ii + a < Hs) & (jj + b >= 0) & (jj + b < Ws))
            mask_rows.append(m.astype(f32))
    masks = jnp.stack(mask_rows, axis=0)                                   # (K*K, HW)

    kern = functools.partial(_reconstruct_kernel,
                             K, pad, N, Cin, Cout, Hs, Ws, float(eps))
    out = pl.pallas_call(
        kern,
        grid=(1,),
        in_specs=[
            pl.BlockSpec(memory_space=pltpu.MemorySpace.SMEM),             # wmix (2,)
            pl.BlockSpec((N * Cin, HW), lambda i: (0, 0)),                 # upsampled x_C
            pl.BlockSpec((N * Cout, HW), lambda i: (0, 0)),                # skip input x
            pl.BlockSpec((K * K, HW), lambda i: (0, 0)),                   # boundary masks
            pl.BlockSpec((N * Cin, K * K), lambda i: (0, 0)),              # depthwise weights
            pl.BlockSpec((N * Cin, 1), lambda i: (0, 0)),                  # depthwise bias
            pl.BlockSpec((N * Cout, N * Cin), lambda i: (0, 0)),           # 1x1 weights (block-diag)
            pl.BlockSpec((N * Cout, 1), lambda i: (0, 0)),                 # 1x1 bias
            pl.BlockSpec((Cout, 1), lambda i: (0, 0)),                     # BN gamma
            pl.BlockSpec((Cout, 1), lambda i: (0, 0)),                     # BN beta
        ],
        out_specs=pl.BlockSpec((N * Cout, HW), lambda i: (0, 0)),
        out_shape=jax.ShapeDtypeStruct((N * Cout, HW), f32),
        compiler_params=pltpu.CompilerParams(dimension_semantics=("arbitrary",)),
    )(wmix, xup, xskip, masks, wdw_t, bdw, wpw_blk, bpw, gamma, beta)

    return out.reshape(N, Cout, Hs, Ws)


def reference(x_C, x, params, kernel_size, scale_factor, eps=1e-5):
    """Pure-JAX reference (NCHW) mirroring the PyTorch forward."""
    K = kernel_size
    pad = 1 if K == 3 else 0
    sf = scale_factor
    N, Cin, H, W = x_C.shape
    Hs, Ws = H * sf, W * sf
    xup = jnp.repeat(jnp.repeat(x_C, sf, axis=2), sf, axis=3)
    xpad = jnp.pad(xup, ((0, 0), (0, 0), (pad, pad), (pad, pad)))
    dw = jnp.zeros((N, Cin, Hs, Ws), jnp.float32)
    for di in range(K):
        for dj in range(K):
            dw = dw + xpad[:, :, di:di + Hs, dj:dj + Ws] * params["wdw"][di, dj][None, :, None, None]
    dw = dw + params["bdw"][None, :, None, None]
    y = jnp.einsum("nchw,cd->ndhw", dw, params["wpw"]) + params["bpw"][None, :, None, None]
    w = jax.nn.softmax(params["wmix"])
    out = w[0] * y + w[1] * x
    mean = out.mean(axis=(0, 2, 3), keepdims=True)
    var = out.var(axis=(0, 2, 3), keepdims=True)
    out = (out - mean) / jnp.sqrt(var + eps)
    out = out * params["gamma"][None, :, None, None] + params["beta"][None, :, None, None]
    return jnp.maximum(out, 0.0)


if __name__ == "__main__":
    # Small shapes: in_channels=4, out_channels=8, kernel_size=3, scale_factor=2
    N, Cin, Cout, H, W, K, SF = 2, 4, 8, 8, 8, 3, 2
    Hs, Ws = H * SF, W * SF

    key = jax.random.PRNGKey(0)
    k1, k2, k3, k4, k5, k6 = jax.random.split(key, 6)
    params = dict(
        wdw=jax.random.normal(k1, (K, K, Cin), jnp.float32) * 0.3,   # depthwise conv weight
        bdw=jax.random.normal(k2, (Cin,), jnp.float32) * 0.1,        # depthwise conv bias
        wpw=jax.random.normal(k3, (Cin, Cout), jnp.float32) * 0.3,   # 1x1 conv weight
        bpw=jax.random.normal(k4, (Cout,), jnp.float32) * 0.1,       # 1x1 conv bias
        wmix=jnp.ones((2,), jnp.float32),                            # nn.Parameter(torch.ones(2))
        gamma=jnp.ones((Cout,), jnp.float32),                        # BatchNorm2d weight (default)
        beta=jnp.zeros((Cout,), jnp.float32),                        # BatchNorm2d bias (default)
    )

    # PyTorch-style NCHW inputs.
    x_C = jax.random.normal(k5, (N, Cin, H, W), jnp.float32)
    x = jax.random.normal(k6, (N, Cout, Hs, Ws), jnp.float32)

    out = reconstruct_forward(x_C, x, params, kernel_size=K, scale_factor=SF)
    out = jax.block_until_ready(out)

    ref = reference(x_C, x, params, K, SF)
    assert out.shape == (N, Cout, Hs, Ws)
    err = float(jnp.max(jnp.abs(out - ref)))
    assert jnp.allclose(out, ref, atol=2e-3, rtol=2e-3), f"max abs err {err}"
    print("KERNEL_OK")
</pallas_src>

<mosaic_0001>
module attributes {stable_mosaic.version = 11 : i64} {
  func.func @_reconstruct_kernel(%arg0: i32, %arg1: memref<2xf32, #tpu.memory_space<smem>>, %arg2: memref<8x256xf32, #tpu.memory_space<vmem>>, %arg3: memref<16x256xf32, #tpu.memory_space<vmem>>, %arg4: memref<9x256xf32, #tpu.memory_space<vmem>>, %arg5: memref<8x9xf32, #tpu.memory_space<vmem>>, %arg6: memref<8x1xf32, #tpu.memory_space<vmem>>, %arg7: memref<16x8xf32, #tpu.memory_space<vmem>>, %arg8: memref<16x1xf32, #tpu.memory_space<vmem>>, %arg9: memref<8x1xf32, #tpu.memory_space<vmem>>, %arg10: memref<8x1xf32, #tpu.memory_space<vmem>>, %arg11: memref<16x256xf32, #tpu.memory_space<vmem>>) attributes {dimension_semantics = [#tpu.dimension_semantics<arbitrary>], iteration_bounds = array<i64: 1>, scalar_prefetch = 0 : i64, scratch_operands = 0 : i64, tpu.core_type = #tpu.core_type<tc>, window_params = [{transform_indices = @transform_0, window_bounds = array<i64: 2>}, {pipeline_mode = #tpu.pipeline_mode<synchronous>, transform_indices = @transform_1, window_bounds = array<i64: 8, 256>}, {pipeline_mode = #tpu.pipeline_mode<synchronous>, transform_indices = @transform_2, window_bounds = array<i64: 16, 256>}, {pipeline_mode = #tpu.pipeline_mode<synchronous>, transform_indices = @transform_3, window_bounds = array<i64: 9, 256>}, {pipeline_mode = #tpu.pipeline_mode<synchronous>, transform_indices = @transform_4, window_bounds = array<i64: 8, 9>}, {pipeline_mode = #tpu.pipeline_mode<synchronous>, transform_indices = @transform_5, window_bounds = array<i64: 8, 1>}, {pipeline_mode = #tpu.pipeline_mode<synchronous>, transform_indices = @transform_6, window_bounds = array<i64: 16, 8>}, {pipeline_mode = #tpu.pipeline_mode<synchronous>, transform_indices = @transform_7, window_bounds = array<i64: 16, 1>}, {pipeline_mode = #tpu.pipeline_mode<synchronous>, transform_indices = @transform_8, window_bounds = array<i64: 8, 1>}, {pipeline_mode = #tpu.pipeline_mode<synchronous>, transform_indices = @transform_9, window_bounds = array<i64: 8, 1>}, {pipeline_mode = #tpu.pipeline_mode<synchronous>, transform_indices = @transform_10, window_bounds = array<i64: 16, 256>}]} {
    %c0 = arith.constant 0 : index
    %c0_0 = arith.constant 0 : index
    %0 = vector.load %arg2[%c0, %c0_0] : memref<8x256xf32, #tpu.memory_space<vmem>>, vector<8x256xf32>
    %cst = arith.constant 0.000000e+00 : f32
    %1 = vector.broadcast %cst : f32 to vector<8x256xf32>
    %c17_i32 = arith.constant 17 : i32
    %2 = tpu.dynamic_rotate %0 by %c17_i32 dim 1 : vector<8x256xf32>, i32 -> vector<8x256xf32>
    %c0_1 = arith.constant 0 : index
    %c0_2 = arith.constant 0 : index
    %3 = vector.load %arg5[%c0_1, %c0_2] : memref<8x9xf32, #tpu.memory_space<vmem>>, vector<8x1xf32>
    %4 = vector.broadcast %3 : vector<8x1xf32> to vector<8x256xf32>
    %5 = arith.mulf %2, %4 : vector<8x256xf32>
    %c0_3 = arith.constant 0 : index
    %c0_4 = arith.constant 0 : index
    %6 = vector.load %arg4[%c0_3, %c0_4] : memref<9x256xf32, #tpu.memory_space<vmem>>, vector<1x256xf32>
    %7 = vector.broadcast %6 : vector<1x256xf32> to vector<8x256xf32>
    %8 = arith.mulf %5, %7 : vector<8x256xf32>
    %9 = arith.addf %1, %8 : vector<8x256xf32>
    %c16_i32 = arith.constant 16 : i32
    %10 = tpu.dynamic_rotate %0 by %c16_i32 dim 1 : vector<8x256xf32>, i32 -> vector<8x256xf32>
    %c0_5 = arith.constant 0 : index
    %c1 = arith.constant 1 : index
    %11 = vector.load %arg5[%c0_5, %c1] : memref<8x9xf32, #tpu.memory_space<vmem>>, vector<8x1xf32>
    %12 = vector.broadcast %11 : vector<8x1xf32> to vector<8x256xf32>
    %13 = arith.mulf %10, %12 : vector<8x256xf32>
    %c1_6 = arith.constant 1 : index
    %c0_7 = arith.constant 0 : index
    %14 = vector.load %arg4[%c1_6, %c0_7] : memref<9x256xf32, #tpu.memory_space<vmem>>, vector<1x256xf32>
    %15 = vector.broadcast %14 : vector<1x256xf32> to vector<8x256xf32>
    %16 = arith.mulf %13, %15 : vector<8x256xf32>
    %17 = arith.addf %9, %16 : vector<8x256xf32>
    %c15_i32 = arith.constant 15 : i32
    %18 = tpu.dynamic_rotate %0 by %c15_i32 dim 1 : vector<8x256xf32>, i32 -> vector<8x256xf32>
    %c0_8 = arith.constant 0 : index
    %c2 = arith.constant 2 : index
    %19 = vector.load %arg5[%c0_8, %c2] : memref<8x9xf32, #tpu.memory_space<vmem>>, vector<8x1xf32>
    %20 = vector.broadcast %19 : vector<8x1xf32> to vector<8x256xf32>
    %21 = arith.mulf %18, %20 : vector<8x256xf32>
    %c2_9 = arith.constant 2 : index
    %c0_10 = arith.constant 0 : index
    %22 = vector.load %arg4[%c2_9, %c0_10] : memref<9x256xf32, #tpu.memory_space<vmem>>, vector<1x256xf32>
    %23 = vector.broadcast %22 : vector<1x256xf32> to vector<8x256xf32>
    %24 = arith.mulf %21, %23 : vector<8x256xf32>
    %25 = arith.addf %17, %24 : vector<8x256xf32>
    %c1_i32 = arith.constant 1 : i32
    %26 = tpu.dynamic_rotate %0 by %c1_i32 dim 1 : vector<8x256xf32>, i32 -> vector<8x256xf32>
    %c0_11 = arith.constant 0 : index
    %c3 = arith.constant 3 : index
    %27 = vector.load %arg5[%c0_11, %c3] : memref<8x9xf32, #tpu.memory_space<vmem>>, vector<8x1xf32>
    %28 = vector.broadcast %27 : vector<8x1xf32> to vector<8x256xf32>
    %29 = arith.mulf %26, %28 : vector<8x256xf32>
    %c3_12 = arith.constant 3 : index
    %c0_13 = arith.constant 0 : index
    %30 = vector.load %arg4[%c3_12, %c0_13] : memref<9x256xf32, #tpu.memory_space<vmem>>, vector<1x256xf32>
    %31 = vector.broadcast %30 : vector<1x256xf32> to vector<8x256xf32>
    %32 = arith.mulf %29, %31 : vector<8x256xf32>
    %33 = arith.addf %25, %32 : vector<8x256xf32>
    %c0_14 = arith.constant 0 : index
    %c4 = arith.constant 4 : index
    %34 = vector.load %arg5[%c0_14, %c4] : memref<8x9xf32, #tpu.memory_space<vmem>>, vector<8x1xf32>
    %35 = vector.broadcast %34 : vector<8x1xf32> to vector<8x256xf32>
    %36 = arith.mulf %0, %35 : vector<8x256xf32>
    %c4_15 = arith.constant 4 : index
    %c0_16 = arith.constant 0 : index
    %37 = vector.load %arg4[%c4_15, %c0_16] : memref<9x256xf32, #tpu.memory_space<vmem>>, vector<1x256xf32>
    %38 = vector.broadcast %37 : vector<1x256xf32> to vector<8x256xf32>
    %39 = arith.mulf %36, %38 : vector<8x256xf32>
    %40 = arith.addf %33, %39 : vector<8x256xf32>
    %c255_i32 = arith.constant 255 : i32
    %41 = tpu.dynamic_rotate %0 by %c255_i32 dim 1 : vector<8x256xf32>, i32 -> vector<8x256xf32>
    %c0_17 = arith.constant 0 : index
    %c5 = arith.constant 5 : index
    %42 = vector.load %arg5[%c0_17, %c5] : memref<8x9xf32, #tpu.memory_space<vmem>>, vector<8x1xf32>
    %43 = vector.broadcast %42 : vector<8x1xf32> to vector<8x256xf32>
    %44 = arith.mulf %41, %43 : vector<8x256xf32>
    %c5_18 = arith.constant 5 : index
    %c0_19 = arith.constant 0 : index
    %45 = vector.load %arg4[%c5_18, %c0_19] : memref<9x256xf32, #tpu.memory_space<vmem>>, vector<1x256xf32>
    %46 = vector.broadcast %45 : vector<1x256xf32> to vector<8x256xf32>
    %47 = arith.mulf %44, %46 : vector<8x256xf32>
    %48 = arith.addf %40, %47 : vector<8x256xf32>
    %c241_i32 = arith.constant 241 : i32
    %49 = tpu.dynamic_rotate %0 by %c241_i32 dim 1 : vector<8x256xf32>, i32 -> vector<8x256xf32>
    %c0_20 = arith.constant 0 : index
    %c6 = arith.constant 6 : index
    %50 = vector.load %arg5[%c0_20, %c6] : memref<8x9xf32, #tpu.memory_space<vmem>>, vector<8x1xf32>
    %51 = vector.broadcast %50 : vector<8x1xf32> to vector<8x256xf32>
    %52 = arith.mulf %49, %51 : vector<8x256xf32>
    %c6_21 = arith.constant 6 : index
    %c0_22 = arith.constant 0 : index
    %53 = vector.load %arg4[%c6_21, %c0_22] : memref<9x256xf32, #tpu.memory_space<vmem>>, vector<1x256xf32>
    %54 = vector.broadcast %53 : vector<1x256xf32> to vector<8x256xf32>
    %55 = arith.mulf %52, %54 : vector<8x256xf32>
    %56 = arith.addf %48, %55 : vector<8x256xf32>
    %c240_i32 = arith.constant 240 : i32
    %57 = tpu.dynamic_rotate %0 by %c240_i32 dim 1 : vector<8x256xf32>, i32 -> vector<8x256xf32>
    %c0_23 = arith.constant 0 : index
    %c7 = arith.constant 7 : index
    %58 = vector.load %arg5[%c0_23, %c7] : memref<8x9xf32, #tpu.memory_space<vmem>>, vector<8x1xf32>
    %59 = vector.broadcast %58 : vector<8x1xf32> to vector<8x256xf32>
    %60 = arith.mulf %57, %59 : vector<8x256xf32>
    %c7_24 = arith.constant 7 : index
    %c0_25 = arith.constant 0 : index
    %61 = vector.load %arg4[%c7_24, %c0_25] : memref<9x256xf32, #tpu.memory_space<vmem>>, vector<1x256xf32>
    %62 = vector.broadcast %61 : vector<1x256xf32> to vector<8x256xf32>
    %63 = arith.mulf %60, %62 : vector<8x256xf32>
    %64 = arith.addf %56, %63 : vector<8x256xf32>
    %c239_i32 = arith.constant 239 : i32
    %65 = tpu.dynamic_rotate %0 by %c239_i32 dim 1 : vector<8x256xf32>, i32 -> vector<8x256xf32>
    %c0_26 = arith.constant 0 : index
    %c8 = arith.constant 8 : index
    %66 = vector.load %arg5[%c0_26, %c8] : memref<8x9xf32, #tpu.memory_space<vmem>>, vector<8x1xf32>
    %67 = vector.broadcast %66 : vector<8x1xf32> to vector<8x256xf32>
    %68 = arith.mulf %65, %67 : vector<8x256xf32>
    %c8_27 = arith.constant 8 : index
    %c0_28 = arith.constant 0 : index
    %69 = vector.load %arg4[%c8_27, %c0_28] : memref<9x256xf32, #tpu.memory_space<vmem>>, vector<1x256xf32>
    %70 = vector.broadcast %69 : vector<1x256xf32> to vector<8x256xf32>
    %71 = arith.mulf %68, %70 : vector<8x256xf32>
    %72 = arith.addf %64, %71 : vector<8x256xf32>
    %c0_29 = arith.constant 0 : index
    %c0_30 = arith.constant 0 : index
    %73 = vector.load %arg6[%c0_29, %c0_30] : memref<8x1xf32, #tpu.memory_space<vmem>>, vector<8x1xf32>
    %74 = vector.broadcast %73 : vector<8x1xf32> to vector<8x256xf32>
    %75 = arith.addf %72, %74 : vector<8x256xf32>
    %c0_31 = arith.constant 0 : index
    %c0_32 = arith.constant 0 : index
    %76 = vector.load %arg7[%c0_31, %c0_32] : memref<16x8xf32, #tpu.memory_space<vmem>>, vector<16x8xf32>
    %cst_33 = arith.constant dense<0.000000e+00> : vector<16x256xf32>
    %77 = tpu.matmul %76, %75, %cst_33 {dimension_numbers = #tpu.dot_dimension_numbers<[1], [0], [0], [1], [0, 0, 1, 1], [], []>} : vector<16x8xf32>, vector<8x256xf32>, vector<16x256xf32> -> vector<16x256xf32>
    %c0_34 = arith.constant 0 : index
    %c0_35 = arith.constant 0 : index
    %78 = vector.load %arg8[%c0_34, %c0_35] : memref<16x1xf32, #tpu.memory_space<vmem>>, vector<16x1xf32>
    %79 = vector.broadcast %78 : vector<16x1xf32> to vector<16x256xf32>
    %80 = arith.addf %77, %79 : vector<16x256xf32>
    %c0_36 = arith.constant 0 : index
    %81 = memref.load %arg1[%c0_36] : memref<2xf32, #tpu.memory_space<smem>>
    %82 = vector.broadcast %81 : f32 to vector<16x256xf32>
    %83 = arith.mulf %82, %80 : vector<16x256xf32>
    %c1_37 = arith.constant 1 : index
    %84 = memref.load %arg1[%c1_37] : memref<2xf32, #tpu.memory_space<smem>>
    %c0_38 = arith.constant 0 : index
    %c0_39 = arith.constant 0 : index
    %85 = vector.load %arg3[%c0_38, %c0_39] : memref<16x256xf32, #tpu.memory_space<vmem>>, vector<16x256xf32>
    %86 = vector.broadcast %84 : f32 to vector<16x256xf32>
    %87 = arith.mulf %86, %85 : vector<16x256xf32>
    %88 = arith.addf %83, %87 : vector<16x256xf32>
    %cst_40 = arith.constant dense<0.000000e+00> : vector<16xf32>
    %89 = vector.multi_reduction <add>, %88, %cst_40 [1] : vector<16x256xf32> to vector<16xf32>
    %90 = vector.shape_cast %89 : vector<16xf32> to vector<16x1xf32>
    %91 = arith.mulf %88, %88 : vector<16x256xf32>
    %cst_41 = arith.constant dense<0.000000e+00> : vector<16xf32>
    %92 = vector.multi_reduction <add>, %91, %cst_41 [1] : vector<16x256xf32> to vector<16xf32>
    %93 = vector.shape_cast %92 : vector<16xf32> to vector<16x1xf32>
    %94 = vector.extract_strided_slice %90 {offsets = [0, 0], sizes = [8, 1], strides = [1, 1]} : vector<16x1xf32> to vector<8x1xf32>
    %95 = vector.extract_strided_slice %93 {offsets = [0, 0], sizes = [8, 1], strides = [1, 1]} : vector<16x1xf32> to vector<8x1xf32>
    %96 = vector.extract_strided_slice %90 {offsets = [8, 0], sizes = [8, 1], strides = [1, 1]} : vector<16x1xf32> to vector<8x1xf32>
    %97 = arith.addf %94, %96 : vector<8x1xf32>
    %98 = vector.extract_strided_slice %93 {offsets = [8, 0], sizes = [8, 1], strides = [1, 1]} : vector<16x1xf32> to vector<8x1xf32>
    %99 = arith.addf %95, %98 : vector<8x1xf32>
    %cst_42 = arith.constant 0.001953125 : f32
    %100 = vector.broadcast %cst_42 : f32 to vector<8x1xf32>
    %101 = arith.mulf %97, %100 : vector<8x1xf32>
    %cst_43 = arith.constant 0.001953125 : f32
    %102 = vector.broadcast %cst_43 : f32 to vector<8x1xf32>
    %103 = arith.mulf %99, %102 : vector<8x1xf32>
    %104 = arith.mulf %101, %101 : vector<8x1xf32>
    %105 = arith.subf %103, %104 : vector<8x1xf32>
    %c0_44 = arith.constant 0 : index
    %c0_45 = arith.constant 0 : index
    %106 = vector.load %arg9[%c0_44, %c0_45] : memref<8x1xf32, #tpu.memory_space<vmem>>, vector<8x1xf32>
    %cst_46 = arith.constant 9.99999974E-6 : f32
    %107 = vector.broadcast %cst_46 : f32 to vector<8x1xf32>
    %108 = arith.addf %105, %107 : vector<8x1xf32>
    %109 = math.sqrt %108 : vector<8x1xf32>
    %110 = arith.divf %106, %109 : vector<8x1xf32>
    %c0_47 = arith.constant 0 : index
    %c0_48 = arith.constant 0 : index
    %111 = vector.load %arg10[%c0_47, %c0_48] : memref<8x1xf32, #tpu.memory_space<vmem>>, vector<8x1xf32>
    %112 = arith.mulf %101, %110 : vector<8x1xf32>
    %113 = arith.subf %111, %112 : vector<8x1xf32>
    %114 = vector.extract_strided_slice %88 {offsets = [0, 0], sizes = [8, 256], strides = [1, 1]} : vector<16x256xf32> to vector<8x256xf32>
    %115 = vector.broadcast %110 : vector<8x1xf32> to vector<8x256xf32>
    %116 = arith.mulf %114, %115 : vector<8x256xf32>
    %117 = vector.broadcast %113 : vector<8x1xf32> to vector<8x256xf32>
    %118 = arith.addf %116, %117 : vector<8x256xf32>
    %cst_49 = arith.constant 0.000000e+00 : f32
    %119 = vector.broadcast %cst_49 : f32 to vector<8x256xf32>
    %120 = arith.maximumf %118, %119 : vector<8x256xf32>
    %c0_50 = arith.constant 0 : index
    %c0_51 = arith.constant 0 : index
    %121 = vector.load %arg11[%c0_50, %c0_51] : memref<16x256xf32, #tpu.memory_space<vmem>>, vector<8x256xf32>
    tpu.vector_store %arg11[%c0_50, %c0_51], %120 {strides = array<i32>} : memref<16x256xf32, #tpu.memory_space<vmem>>, vector<8x256xf32>,
    %122 = vector.extract_strided_slice %88 {offsets = [8, 0], sizes = [8, 256], strides = [1, 1]} : vector<16x256xf32> to vector<8x256xf32>
    %123 = vector.broadcast %110 : vector<8x1xf32> to vector<8x256xf32>
    %124 = arith.mulf %122, %123 : vector<8x256xf32>
    %125 = vector.broadcast %113 : vector<8x1xf32> to vector<8x256xf32>
    %126 = arith.addf %124, %125 : vector<8x256xf32>
    %cst_52 = arith.constant 0.000000e+00 : f32
    %127 = vector.broadcast %cst_52 : f32 to vector<8x256xf32>
    %128 = arith.maximumf %126, %127 : vector<8x256xf32>
    %c8_53 = arith.constant 8 : index
    %c0_54 = arith.constant 0 : index
    %129 = vector.load %arg11[%c8_53, %c0_54] : memref<16x256xf32, #tpu.memory_space<vmem>>, vector<8x256xf32>
    tpu.vector_store %arg11[%c8_53, %c0_54], %128 {strides = array<i32>} : memref<16x256xf32, #tpu.memory_space<vmem>>, vector<8x256xf32>,
    return
  }
  func.func @transform_0(%arg0: i32) -> i32 {
    %c0_i32 = arith.constant 0 : i32
    %c0_i32_0 = arith.constant 0 : i32
    return %c0_i32 : i32
  }
  func.func @transform_1(%arg0: i32) -> (i32, i32) {
    %c0_i32 = arith.constant 0 : i32
    %c0_i32_0 = arith.constant 0 : i32
    %c0_i32_1 = arith.constant 0 : i32
    return %c0_i32, %c0_i32_0 : i32, i32
  }
  func.func @transform_2(%arg0: i32) -> (i32, i32) {
    %c0_i32 = arith.constant 0 : i32
    %c0_i32_0 = arith.constant 0 : i32
    %c0_i32_1 = arith.constant 0 : i32
    return %c0_i32, %c0_i32_0 : i32, i32
  }
  func.func @transform_3(%arg0: i32) -> (i32, i32) {
    %c0_i32 = arith.constant 0 : i32
    %c0_i32_0 = arith.constant 0 : i32
    %c0_i32_1 = arith.constant 0 : i32
    return %c0_i32, %c0_i32_0 : i32, i32
  }
  func.func @transform_4(%arg0: i32) -> (i32, i32) {
    %c0_i32 = arith.constant 0 : i32
    %c0_i32_0 = arith.constant 0 : i32
    %c0_i32_1 = arith.constant 0 : i32
    return %c0_i32, %c0_i32_0 : i32, i32
  }
  func.func @transform_5(%arg0: i32) -> (i32, i32) {
    %c0_i32 = arith.constant 0 : i32
    %c0_i32_0 = arith.constant 0 : i32
    %c0_i32_1 = arith.constant 0 : i32
    return %c0_i32, %c0_i32_0 : i32, i32
  }
  func.func @transform_6(%arg0: i32) -> (i32, i32) {
    %c0_i32 = arith.constant 0 : i32
    %c0_i32_0 = arith.constant 0 : i32
    %c0_i32_1 = arith.constant 0 : i32
    return %c0_i32, %c0_i32_0 : i32, i32
  }
  func.func @transform_7(%arg0: i32) -> (i32, i32) {
    %c0_i32 = arith.constant 0 : i32
    %c0_i32_0 = arith.constant 0 : i32
    %c0_i32_1 = arith.constant 0 : i32
    return %c0_i32, %c0_i32_0 : i32, i32
  }
  func.func @transform_8(%arg0: i32) -> (i32, i32) {
    %c0_i32 = arith.constant 0 : i32
    %c0_i32_0 = arith.constant 0 : i32
    %c0_i32_1 = arith.constant 0 : i32
    return %c0_i32, %c0_i32_0 : i32, i32
  }
  func.func @transform_9(%arg0: i32) -> (i32, i32) {
    %c0_i32 = arith.constant 0 : i32
    %c0_i32_0 = arith.constant 0 : i32
    %c0_i32_1 = arith.constant 0 : i32
    return %c0_i32, %c0_i32_0 : i32, i32
  }
  func.func @transform_10(%arg0: i32) -> (i32, i32) {
    %c0_i32 = arith.constant 0 : i32
    %c0_i32_0 = arith.constant 0 : i32
    %c0_i32_1 = arith.constant 0 : i32
    return %c0_i32, %c0_i32_0 : i32, i32
  }
}

</mosaic_0001>

<llo_original>
// kernel: reconstruct_forward.1
$region0: #{reconstruct_forward.1}
  #allocation0 [shape = 'u32[]', space=smem, size = 0x4, offset = 0x4, fixed_abs, tag = 'smem constant byte address 0x4 - core index']
  #allocation1 [shape = 'u32[144,128]{1,0:T(1,128)}', space=vmem, size = 0x12000, scoped, tag = 'internal scratch']
  %s0 = inlined_call_operand.vmem [shape: f32[2], index: 0, kind: input, shape index: {}]
  %s1 = inlined_call_operand.vmem [shape: f32[8,256], index: 1, kind: input, shape index: {}]
  %s2 = inlined_call_operand.vmem [shape: f32[16,256], index: 2, kind: input, shape index: {}]
  %s3 = inlined_call_operand.vmem [shape: f32[9,256], index: 3, kind: input, shape index: {}]
  %s4 = inlined_call_operand.vmem [shape: f32[8,9], index: 4, kind: input, shape index: {}]
  %s5 = inlined_call_operand.vmem [shape: f32[8,1], index: 5, kind: input, shape index: {}]
  %s6 = inlined_call_operand.vmem [shape: f32[16,8], index: 6, kind: input, shape index: {}]
  %s7 = inlined_call_operand.vmem [shape: f32[16,1], index: 7, kind: input, shape index: {}]
  %s8 = inlined_call_operand.vmem [shape: f32[8,1], index: 8, kind: input, shape index: {}]
  %s9 = inlined_call_operand.vmem [shape: f32[8,1], index: 9, kind: input, shape index: {}]
  %s10 = inlined_call_operand.vmem [shape: f32[16,256], index: 10, kind: output, shape index: {}]
  %s11 = sld [smem:[#allocation0]]
  $region54: #{reconstruct_forward.1} parent=0
    _
  %s13 = ssub.s32 1, %s11
  %s14 = scalar_select 0, %s13, %s11
  $region1: #{reconstruct_forward.1} parent=0
    #allocation2 [shape = 'u8[512]{0}', space=smem, size = 0x200, scoped, tag = 'input window, operand 0, single buffered']
    #allocation3 [shape = 's32[1]{0}', space=sflag, size = 0x4, scoped, tag = 'scoped memory for reconstruct_forward.1']
    %15 = vsyncpa [#allocation3], 0
    // Predicated region
    $region2: #{reconstruct_forward.1} parent=1 // pred_check
      _
    $region3: #{reconstruct_forward.1} parent=1 // pred_check_branch
      %17 = sbr.rel (0) target = $region5
    $region4: #{reconstruct_forward.1} parent=1 // pred_region
      %s19 = ssub.s32 16, 16
      %20 = vsyncadd [#allocation3], %s19
      %s22 = sshll.u32 %s0, 4
      %s23 = int_to_ptr.vmem [resolvable:$true] %s22
      %25 = dma.vmem_to_smem %s23, 16, [#allocation2], [#allocation3]
    $region5: #{reconstruct_forward.1} parent=1 // pred_fallthru
      _
    // Predicated region
    $region6: #{reconstruct_forward.1} parent=1 // pred_check
      _
    $region7: #{reconstruct_forward.1} parent=1 // pred_check_branch
      %27 = sbr.rel (0) target = $region9
    $region8: #{reconstruct_forward.1} parent=1 // pred_region
      _
    $region9: #{reconstruct_forward.1} parent=1 // pred_fallthru
      _
    // Predicated region
    $region10: #{reconstruct_forward.1} parent=1 // pred_check
      _
    $region11: #{reconstruct_forward.1} parent=1 // pred_check_branch
      %29 = sbr.rel (0) target = $region13
    $region12: #{reconstruct_forward.1} parent=1 // pred_region
      _
    $region13: #{reconstruct_forward.1} parent=1 // pred_fallthru
      _
    // Predicated region
    $region14: #{reconstruct_forward.1} parent=1 // pred_check
      _
    $region15: #{reconstruct_forward.1} parent=1 // pred_check_branch
      %31 = sbr.rel (0) target = $region17
    $region16: #{reconstruct_forward.1} parent=1 // pred_region
      _
    $region17: #{reconstruct_forward.1} parent=1 // pred_fallthru
      _
    // Predicated region
    $region18: #{reconstruct_forward.1} parent=1 // pred_check
      _
    $region19: #{reconstruct_forward.1} parent=1 // pred_check_branch
      %33 = sbr.rel (0) target = $region21
    $region20: #{reconstruct_forward.1} parent=1 // pred_region
      _
    $region21: #{reconstruct_forward.1} parent=1 // pred_fallthru
      _
    // Predicated region
    $region22: #{reconstruct_forward.1} parent=1 // pred_check
      _
    $region23: #{reconstruct_forward.1} parent=1 // pred_check_branch
      %35 = sbr.rel (0) target = $region25
    $region24: #{reconstruct_forward.1} parent=1 // pred_region
      _
    $region25: #{reconstruct_forward.1} parent=1 // pred_fallthru
      _
    // Predicated region
    $region26: #{reconstruct_forward.1} parent=1 // pred_check
      _
    $region27: #{reconstruct_forward.1} parent=1 // pred_check_branch
      %37 = sbr.rel (0) target = $region29
    $region28: #{reconstruct_forward.1} parent=1 // pred_region
      _
    $region29: #{reconstruct_forward.1} parent=1 // pred_fallthru
      _
    // Predicated region
    $region30: #{reconstruct_forward.1} parent=1 // pred_check
      _
    $region31: #{reconstruct_forward.1} parent=1 // pred_check_branch
      %39 = sbr.rel (0) target = $region33
    $region32: #{reconstruct_forward.1} parent=1 // pred_region
      _
    $region33: #{reconstruct_forward.1} parent=1 // pred_fallthru
      _
    // Predicated region
    $region34: #{reconstruct_forward.1} parent=1 // pred_check
      _
    $region35: #{reconstruct_forward.1} parent=1 // pred_check_branch
      %41 = sbr.rel (0) target = $region37
    $region36: #{reconstruct_forward.1} parent=1 // pred_region
      _
    $region37: #{reconstruct_forward.1} parent=1 // pred_fallthru
      _
    // Predicated region
    $region38: #{reconstruct_forward.1} parent=1 // pred_check
      _
    $region39: #{reconstruct_forward.1} parent=1 // pred_check_branch
      %43 = sbr.rel (0) target = $region41
    $region40: #{reconstruct_forward.1} parent=1 // pred_region
      _
    $region41: #{reconstruct_forward.1} parent=1 // pred_fallthru
      _
    // Predicated region
    $region42: #{reconstruct_forward.1} parent=1 // pred_check
      _
    $region43: #{reconstruct_forward.1} parent=1 // pred_check_branch
      %45 = sbr.rel (0) target = $region45
    $region44: #{reconstruct_forward.1} parent=1 // pred_region
      %46 = dma.done [#allocation3], 16
    $region45: #{reconstruct_forward.1} parent=1 // pred_fallthru
      _
    %47 = sfence
    %v48 = vld [vmem:[%s1] sm:$0xff]
    %v49 = vld [vmem:[%s1 + $0x8] sm:$0xff]
    %50 = vrot.lane.b32.xlu0 %v48, 17
    %v51 = vpop.permute.xlu0 %50
    %52 = vrot.lane.b32.xlu0 %v49, 17
    %v53 = vpop.permute.xlu0 %52
    %v54 = vlaneseq
    %v55 = vand.u32 %v54, 127
    %vm56 = vcmp.lt.s32.totalorder %v55, 17
    %v57 = vsel %vm56, %v51, %v53
    %v58 = vsel %vm56, %v53, %v51
    %v59 = vld [vmem:[%s4] sm:$0xff]
    %61 = vset.pattern.permute.xlu0 0
    %62 = vperm.xlu0 %61, %v59
    %v63 = vpop.permute.xlu0 %62
    %v65 = vmul.f32 %v58, %v63
    %v66 = vmul.f32 %v57, %v63
    %v67 = vld [vmem:[%s3] ss:$8 sm:$0x3]
    %v69 = vlaneseq
    %v70 = vshrl.u32 %v69, 7
    %v71 = vsub.s32 0, %v70
    %v72 = vrot.slane %v67, %v71
    %v73 = vlaneseq
    %v74 = vshrl.u32 %v73, 7
    %v75 = vsub.s32 1, %v74
    %v76 = vrot.slane %v67, %v75
    %v79 = vmul.f32 %v65, %v72
    %v80 = vmul.f32 %v66, %v76
    %v81 = vadd.f32 %v79, 0.0
    %v82 = vadd.f32 %v80, 0.0
    %83 = vrot.lane.b32.xlu0 %v48, 16
    %v84 = vpop.permute.xlu0 %83
    %85 = vrot.lane.b32.xlu0 %v49, 16
    %v86 = vpop.permute.xlu0 %85
    %vm87 = vcmp.lt.s32.totalorder %v55, 16
    %v88 = vsel %vm87, %v84, %v86
    %v89 = vsel %vm87, %v86, %v84
    %90 = vset.pattern.permute.xlu0 1
    %91 = vperm.xlu0 %90, %v59
    %v92 = vpop.permute.xlu0 %91
    %v94 = vmul.f32 %v89, %v92
    %v95 = vmul.f32 %v88, %v92
    %s96 = scalar_lea.vmem %s3, 1
    %v97 = vld [vmem:[%s96] ss:$8 sm:$0x3]
    %v99 = vlaneseq
    %v100 = vshrl.u32 %v99, 7
    %v101 = vsub.s32 0, %v100
    %v102 = vrot.slane %v97, %v101
    %v103 = vlaneseq
    %v104 = vshrl.u32 %v103, 7
    %v105 = vsub.s32 1, %v104
    %v106 = vrot.slane %v97, %v105
    %v109 = vmul.f32 %v94, %v102
    %v110 = vmul.f32 %v95, %v106
    %v111 = vadd.f32 %v81, %v109
    %v112 = vadd.f32 %v82, %v110
    %113 = vrot.lane.b32.xlu0 %v48, 15
    %v114 = vpop.permute.xlu0 %113
    %115 = vrot.lane.b32.xlu0 %v49, 15
    %v116 = vpop.permute.xlu0 %115
    %vm117 = vcmp.lt.s32.totalorder %v55, 15
    %v118 = vsel %vm117, %v114, %v116
    %v119 = vsel %vm117, %v116, %v114
    %120 = vset.pattern.permute.xlu0 2
    %121 = vperm.xlu0 %120, %v59
    %v122 = vpop.permute.xlu0 %121
    %v124 = vmul.f32 %v119, %v122
    %v125 = vmul.f32 %v118, %v122
    %s126 = scalar_lea.vmem %s3, 2
    %v127 = vld [vmem:[%s126] ss:$8 sm:$0x3]
    %v129 = vlaneseq
    %v130 = vshrl.u32 %v129, 7
    %v131 = vsub.s32 0, %v130
    %v132 = vrot.slane %v127, %v131
    %v133 = vlaneseq
    %v134 = vshrl.u32 %v133, 7
    %v135 = vsub.s32 1, %v134
    %v136 = vrot.slane %v127, %v135
    %v139 = vmul.f32 %v124, %v132
    %v140 = vmul.f32 %v125, %v136
    %v141 = vadd.f32 %v111, %v139
    %v142 = vadd.f32 %v112, %v140
    %143 = vrot.lane.b32.xlu0 %v48, 1
    %v144 = vpop.permute.xlu0 %143
    %145 = vrot.lane.b32.xlu0 %v49, 1
    %v146 = vpop.permute.xlu0 %145
    %vm147 = vcmp.lt.s32.totalorder %v55, 1
    %v148 = vsel %vm147, %v144, %v146
    %v149 = vsel %vm147, %v146, %v144
    %150 = vset.pattern.permute.xlu0 3
    %151 = vperm.xlu0 %150, %v59
    %v152 = vpop.permute.xlu0 %151
    %v154 = vmul.f32 %v149, %v152
    %v155 = vmul.f32 %v148, %v152
    %s156 = scalar_lea.vmem %s3, 3
    %v157 = vld [vmem:[%s156] ss:$8 sm:$0x3]
    %v159 = vlaneseq
    %v160 = vshrl.u32 %v159, 7
    %v161 = vsub.s32 0, %v160
    %v162 = vrot.slane %v157, %v161
    %v163 = vlaneseq
    %v164 = vshrl.u32 %v163, 7
    %v165 = vsub.s32 1, %v164
    %v166 = vrot.slane %v157, %v165
    %v169 = vmul.f32 %v154, %v162
    %v170 = vmul.f32 %v155, %v166
    %v171 = vadd.f32 %v141, %v169
    %v172 = vadd.f32 %v142, %v170
    %173 = vset.pattern.permute.xlu0 4
    %174 = vperm.xlu0 %173, %v59
    %v175 = vpop.permute.xlu0 %174
    %v177 = vmul.f32 %v48, %v175
    %v178 = vmul.f32 %v49, %v175
    %s179 = scalar_lea.vmem %s3, 4
    %v180 = vld [vmem:[%s179] ss:$8 sm:$0x3]
    %v182 = vlaneseq
    %v183 = vshrl.u32 %v182, 7
    %v184 = vsub.s32 0, %v183
    %v185 = vrot.slane %v180, %v184
    %v186 = vlaneseq
    %v187 = vshrl.u32 %v186, 7
    %v188 = vsub.s32 1, %v187
    %v189 = vrot.slane %v180, %v188
    %v192 = vmul.f32 %v177, %v185
    %v193 = vmul.f32 %v178, %v189
    %v194 = vadd.f32 %v171, %v192
    %v195 = vadd.f32 %v172, %v193
    %196 = vrot.lane.b32.xlu0 %v48, 127
    %v197 = vpop.permute.xlu0 %196
    %198 = vrot.lane.b32.xlu0 %v49, 127
    %v199 = vpop.permute.xlu0 %198
    %vm200 = vcmp.lt.s32.totalorder %v55, 127
    %v201 = vsel %vm200, %v197, %v199
    %v202 = vsel %vm200, %v199, %v197
    %203 = vset.pattern.permute.xlu0 5
    %204 = vperm.xlu0 %203, %v59
    %v205 = vpop.permute.xlu0 %204
    %v207 = vmul.f32 %v201, %v205
    %v208 = vmul.f32 %v202, %v205
    %s209 = scalar_lea.vmem %s3, 5
    %v210 = vld [vmem:[%s209] ss:$8 sm:$0x3]
    %v212 = vlaneseq
    %v213 = vshrl.u32 %v212, 7
    %v214 = vsub.s32 0, %v213
    %v215 = vrot.slane %v210, %v214
    %v216 = vlaneseq
    %v217 = vshrl.u32 %v216, 7
    %v218 = vsub.s32 1, %v217
    %v219 = vrot.slane %v210, %v218
    %v222 = vmul.f32 %v207, %v215
    %v223 = vmul.f32 %v208, %v219
    %v224 = vadd.f32 %v194, %v222
    %v225 = vadd.f32 %v195, %v223
    %226 = vrot.lane.b32.xlu0 %v48, 113
    %v227 = vpop.permute.xlu0 %226
    %228 = vrot.lane.b32.xlu0 %v49, 113
    %v229 = vpop.permute.xlu0 %228
    %vm230 = vcmp.lt.s32.totalorder %v55, 113
    %v231 = vsel %vm230, %v227, %v229
    %v232 = vsel %vm230, %v229, %v227
    %233 = vset.pattern.permute.xlu0 6
    %234 = vperm.xlu0 %233, %v59
    %v235 = vpop.permute.xlu0 %234
    %v237 = vmul.f32 %v231, %v235
    %v238 = vmul.f32 %v232, %v235
    %s239 = scalar_lea.vmem %s3, 6
    %v240 = vld [vmem:[%s239] ss:$8 sm:$0x3]
    %v242 = vlaneseq
    %v243 = vshrl.u32 %v242, 7
    %v244 = vsub.s32 0, %v243
    %v245 = vrot.slane %v240, %v244
    %v246 = vlaneseq
    %v247 = vshrl.u32 %v246, 7
    %v248 = vsub.s32 1, %v247
    %v249 = vrot.slane %v240, %v248
    %v252 = vmul.f32 %v237, %v245
    %v253 = vmul.f32 %v238, %v249
    %v254 = vadd.f32 %v224, %v252
    %v255 = vadd.f32 %v225, %v253
    %256 = vrot.lane.b32.xlu0 %v48, 112
    %v257 = vpop.permute.xlu0 %256
    %258 = vrot.lane.b32.xlu0 %v49, 112
    %v259 = vpop.permute.xlu0 %258
    %vm260 = vcmp.lt.s32.totalorder %v55, 112
    %v261 = vsel %vm260, %v257, %v259
    %v262 = vsel %vm260, %v259, %v257
    %263 = vset.pattern.permute.xlu0 7
    %264 = vperm.xlu0 %263, %v59
    %v265 = vpop.permute.xlu0 %264
    %v267 = vmul.f32 %v261, %v265
    %v268 = vmul.f32 %v262, %v265
    %s269 = scalar_lea.vmem %s3, 7
    %v270 = vld [vmem:[%s269] ss:$8 sm:$0x3]
    %v272 = vlaneseq
    %v273 = vshrl.u32 %v272, 7
    %v274 = vsub.s32 0, %v273
    %v275 = vrot.slane %v270, %v274
    %v276 = vlaneseq
    %v277 = vshrl.u32 %v276, 7
    %v278 = vsub.s32 1, %v277
    %v279 = vrot.slane %v270, %v278
    %v282 = vmul.f32 %v267, %v275
    %v283 = vmul.f32 %v268, %v279
    %v284 = vadd.f32 %v254, %v282
    %v285 = vadd.f32 %v255, %v283
    %286 = vrot.lane.b32.xlu0 %v48, 111
    %v287 = vpop.permute.xlu0 %286
    %288 = vrot.lane.b32.xlu0 %v49, 111
    %v289 = vpop.permute.xlu0 %288
    %vm290 = vcmp.lt.s32.totalorder %v55, 111
    %v291 = vsel %vm290, %v287, %v289
    %v292 = vsel %vm290, %v289, %v287
    %293 = vset.pattern.permute.xlu0 8
    %294 = vperm.xlu0 %293, %v59
    %v295 = vpop.permute.xlu0 %294
    %v297 = vmul.f32 %v291, %v295
    %v298 = vmul.f32 %v292, %v295
    %s299 = scalar_lea.vmem %s3, 16
    %v300 = vld [vmem:[%s299] ss:$8 sm:$0x3]
    %v302 = vlaneseq
    %v303 = vshrl.u32 %v302, 7
    %v304 = vsub.s32 0, %v303
    %v305 = vrot.slane %v300, %v304
    %v306 = vlaneseq
    %v307 = vshrl.u32 %v306, 7
    %v308 = vsub.s32 1, %v307
    %v309 = vrot.slane %v300, %v308
    %v312 = vmul.f32 %v297, %v305
    %v313 = vmul.f32 %v298, %v309
    %v314 = vadd.f32 %v284, %v312
    %v315 = vadd.f32 %v285, %v313
    %v316 = vld [vmem:[%s5] sm:$0xff]
    %318 = vset.pattern.permute.xlu0 0
    %319 = vperm.xlu0 %318, %v316
    %v320 = vpop.permute.xlu0 %319
    %v322 = vadd.f32 %v314, %v320
    %v323 = vadd.f32 %v315, %v320
    %v324 = vld [vmem:[%s6] sm:$0xff]
    %v325 = vld [vmem:[%s6 + $0x8] sm:$0xff]
    %v326 = vld [vmem:[%s7] sm:$0xff]
    %v327 = vld [vmem:[%s7 + $0x8] sm:$0xff]
    %329 = vset.pattern.permute.xlu0 0
    %330 = vperm.xlu0 %329, %v326
    %v331 = vpop.permute.xlu0 %330
    %334 = vset.pattern.permute.xlu0 0
    %335 = vperm.xlu0 %334, %v327
    %v336 = vpop.permute.xlu0 %335
    %vm338 = vcmask 64512
    %v340 = vsel %vm338, %v324, 0
    %v343 = vsel %vm338, %v325, 0
    %345 = vmatprep.subr.mxu0 0.0
    %346 = vmatpush1.msra.mxu0 0.0
    %347 = vmatprep.subr.mxu0 0.0
    %348 = vmatpush1.msra.mxu0 0.0
    %349 = vmatprep.subr.mxu0 0.0
    %350 = vmatpush1.msra.mxu0 0.0
    %351 = vmatprep.subr.mxu0 0.0
    %352 = vmatpush1.msra.mxu0 0.0
    %353 = vmatprep.subr.mxu0 0.0
    %354 = vmatpush1.msra.mxu0 0.0
    %355 = vmatprep.subr.mxu0 0.0
    %356 = vmatpush1.msra.mxu0 0.0
    %357 = vmatprep.subr.mxu0 0.0
    %358 = vmatpush1.msra.mxu0 0.0
    %359 = vmatprep.subr.mxu0 0.0
    %360 = vmatpush1.msra.mxu0 0.0
    %361 = vmatprep.subr.mxu0 0.0
    %362 = vmatpush1.msra.mxu0 0.0
    %363 = vmatprep.subr.mxu0 0.0
    %364 = vmatpush1.msra.mxu0 0.0
    %365 = vmatprep.subr.mxu0 0.0
    %366 = vmatpush1.msra.mxu0 0.0
    %367 = vmatprep.subr.mxu0 0.0
    %368 = vmatpush1.msra.mxu0 0.0
    %369 = vmatprep.subr.mxu0 0.0
    %370 = vmatpush1.msra.mxu0 0.0
    %371 = vmatprep.subr.mxu0 0.0
    %372 = vmatpush1.msra.mxu0 0.0
    %373 = vmatprep.subr.mxu0 0.0
    %374 = vmatpush1.msra.mxu0 0.0
    %375 = vmatprep.subr.mxu0 %v323
    %376 = vmatpush1.msra.mxu0 %v322
    %377 = vmatprep.subr.mxu0 0.0
    %378 = vmatpush2.msra.mxu0 0.0
    %379 = vmatprep.subr.mxu0 0.0
    %380 = vmatpush2.msra.mxu0 0.0
    %381 = vmatprep.subr.mxu0 0.0
    %382 = vmatpush2.msra.mxu0 0.0
    %383 = vmatprep.subr.mxu0 0.0
    %384 = vmatpush2.msra.mxu0 0.0
    %385 = vmatprep.subr.mxu0 0.0
    %386 = vmatpush2.msra.mxu0 0.0
    %387 = vmatprep.subr.mxu0 0.0
    %388 = vmatpush2.msra.mxu0 0.0
    %389 = vmatprep.subr.mxu0 0.0
    %390 = vmatpush2.msra.mxu0 0.0
    %391 = vmatprep.subr.mxu0 0.0
    %392 = vmatpush2.msra.mxu0 0.0
    %393 = vmatprep.subr.mxu0 0.0
    %394 = vmatpush2.msra.mxu0 0.0
    %395 = vmatprep.subr.mxu0 0.0
    %396 = vmatpush2.msra.mxu0 0.0
    %397 = vmatprep.subr.mxu0 0.0
    %398 = vmatpush2.msra.mxu0 0.0
    %399 = vmatprep.subr.mxu0 0.0
    %400 = vmatpush2.msra.mxu0 0.0
    %401 = vmatprep.subr.mxu0 0.0
    %402 = vmatpush2.msra.mxu0 0.0
    %403 = vmatprep.subr.mxu0 0.0
    %404 = vmatpush2.msra.mxu0 0.0
    %405 = vmatprep.subr.mxu0 0.0
    %406 = vmatpush2.msra.mxu0 0.0
    %407 = vmatprep.subr.mxu0 0.0
    %408 = vmatpush2.msra.mxu0 0.0
    %409 = vmatprep.mubr.f32.mxu0 0.0
    %410 = vmatmul.mubr.f32.gmra.mxu0 %v340
    %v411 = vpop.f32.mrf.mxu0
    %v412 = vadd.f32 %v331, %v411
    %v413 = vpop.f32.mrf.mxu0
    %v414 = vadd.f32 %v331, %v413
    %415 = vmatprep.mubr.f32.mxu0 0.0
    %416 = vmatmul.mubr.f32.gmra.mxu0 %v343
    %v417 = vpop.f32.mrf.mxu0
    %v418 = vadd.f32 %v336, %v417
    %v419 = vpop.f32.mrf.mxu0
    %v420 = vadd.f32 %v336, %v419
    %421 = vdwg.mxu0
    %s422 = sld [smem:[#allocation2]]
    %v423 = vstv %s422
    %v424 = vmul.f32 %v423, %v412
    %v425 = vmul.f32 %v423, %v414
    %v426 = vmul.f32 %v423, %v418
    %v427 = vmul.f32 %v423, %v420
    %s428 = sld [smem:[#allocation2 + $0x1]]
    %v429 = vld [vmem:[%s2] sm:$0xff]
    %v430 = vld [vmem:[%s2 + $0x8] sm:$0xff]
    %v431 = vld [vmem:[%s2 + $0x10] sm:$0xff]
    %v432 = vld [vmem:[%s2 + $0x18] sm:$0xff]
    %v433 = vstv %s428
    %v434 = vmul.f32 %v433, %v429
    %v435 = vmul.f32 %v433, %v430
    %v436 = vmul.f32 %v433, %v431
    %v437 = vmul.f32 %v433, %v432
    %v438 = vadd.f32 %v424, %v434
    %v439 = vadd.f32 %v425, %v435
    %v440 = vadd.f32 %v426, %v436
    %v441 = vadd.f32 %v427, %v437
    %v442 = vadd.f32 %v438, %v439
    %443 = vadd.xlane.f32.xlu0 %v442
    %v444 = vpop.xlane.xlu0 %443
    %v445 = vadd.f32 %v440, %v441
    %446 = vadd.xlane.f32.xlu0 %v445
    %v447 = vpop.xlane.xlu0 %446
    %v448 = vmul.f32 %v438, %v438
    %v449 = vmul.f32 %v439, %v439
    %v450 = vmul.f32 %v440, %v440
    %v451 = vmul.f32 %v441, %v441
    %v452 = vadd.f32 %v448, %v449
    %453 = vadd.xlane.f32.xlu0 %v452
    %v454 = vpop.xlane.xlu0 %453
    %v455 = vadd.f32 %v450, %v451
    %456 = vadd.xlane.f32.xlu0 %v455
    %v457 = vpop.xlane.xlu0 %456
    %v458 = vadd.f32 %v444, %v447
    %v459 = vadd.f32 %v454, %v457
    %v460 = vmul.f32 %v458, 0.001953125
    %v461 = vmul.f32 %v459, 0.001953125
    %v462 = vmul.f32 %v460, %v460
    %v463 = vsub.f32 %v461, %v462
    %v464 = vld [vmem:[%s8] sm:$0xff]
    %v465 = vadd.f32 %v463, 1e-05
    %v466 = vrsqrt.pop %v465
    %v467 = vmul.f32 %v465, %v466
    %vm468 = vcmp.eq.f32.partialorder %v465, inf
    %v469 = vsel %vm468, %v465, %v467
    %vm470 = vcmp.eq.f32.partialorder %v465, 0.0
    %v471 = vand.u32 %v465, 2147483648
    %v472 = vsel %vm470, %v471, %v469
    %v473 = vrcp.pop %v472
    %v474 = vmul.f32 %v464, %v473
    %v475 = vld [vmem:[%s9] sm:$0xff]
    %v476 = vmul.f32 %v460, %v474
    %v477 = vsub.f32 %v475, %v476
    %479 = vset.pattern.permute.xlu0 0
    %480 = vperm.xlu0 %479, %v474
    %v481 = vpop.permute.xlu0 %480
    %v483 = vmul.f32 %v438, %v481
    %v484 = vmul.f32 %v439, %v481
    %486 = vset.pattern.permute.xlu0 0
    %487 = vperm.xlu0 %486, %v477
    %v488 = vpop.permute.xlu0 %487
    %v490 = vadd.f32 %v483, %v488
    %v491 = vadd.f32 %v484, %v488
    %v492 = vmax.f32 %v490, 0.0
    %v493 = vmax.f32 %v491, 0.0
    %494 = vst [vmem:[%s10] sm:$0xff] %v492
    %495 = vst [vmem:[%s10 + $0x8] sm:$0xff] %v493
    %v496 = vmul.f32 %v440, %v481
    %v497 = vmul.f32 %v441, %v481
    %v498 = vadd.f32 %v496, %v488
    %v499 = vadd.f32 %v497, %v488
    %v500 = vmax.f32 %v498, 0.0
    %v501 = vmax.f32 %v499, 0.0
    %502 = vst [vmem:[%s10 + $0x10] sm:$0xff] %v500
    %503 = vst [vmem:[%s10 + $0x18] sm:$0xff] %v501
    // Predicated region
    $region46: #{reconstruct_forward.1} parent=1 // pred_check
      _
    $region47: #{reconstruct_forward.1} parent=1 // pred_check_branch
      %505 = sbr.rel (0) target = $region49
    $region48: #{reconstruct_forward.1} parent=1 // pred_region
      _
    $region49: #{reconstruct_forward.1} parent=1 // pred_fallthru
      _
    // Predicated region
    $region50: #{reconstruct_forward.1} parent=1 // pred_check
      _
    $region51: #{reconstruct_forward.1} parent=1 // pred_check_branch
      %507 = sbr.rel (0) target = $region53
    $region52: #{reconstruct_forward.1} parent=1 // pred_region
      _
    $region53: #{reconstruct_forward.1} parent=1 // pred_fallthru
      _
    %508 = vsyncpa [#allocation3], 1

</llo_original>
